<compile_context>
chip_gen: v6e
topology: v6e:2x2x1
jax: 0.10.0
libtpu: 0.0.40
codegen_flags: <defaults>
</compile_context>

<pallas_src>
import functools

import jax
import jax.numpy as jnp
from jax.experimental import pallas as pl
from jax.experimental.pallas import tpu as pltpu

LN_EPS = 1e-5  # PyTorch nn.LayerNorm default


def _round_up(x, m):
    return (x + m - 1) // m * m


def _vmem_budget_bytes():
    """Per-generation VMEM budget with ~20% headroom (fallback: v7x 64 MiB)."""
    try:
        cap = int(pltpu.get_tpu_info().vmem_capacity_bytes)
    except Exception:
        cap = 64 << 20
    return int(cap * 0.8)


def _vmem_needed(tm, kp, d, x_isz, c_isz, o_isz):
    return (2 * tm * kp * x_isz        # input double-buffer (native dtype)
            + kp * d * c_isz           # single-buffered weight
            + 3 * d * 4                # packed bias / gamma / beta
            + 2 * tm * d * o_isz       # output double-buffer
            + 3 * tm * d * 4)          # f32 matmul acc + LN temporaries


def _select_tile_m(n, kp, d, x_isz, c_isz, o_isz, budget, tile_m_max):
    """Largest row tile that fits the VMEM budget, keeping >=2 grid steps."""
    n_padded = _round_up(n, 8)
    if n > 8:
        tm = _round_up(-(-n // 2), 8)      # ceil(N/2) -> at least 2 grid steps
    else:
        tm = n_padded
    tm = max(8, min(tm, int(tile_m_max), n_padded))
    while tm > 8 and 2 * _vmem_needed(tm, kp, d, x_isz, c_isz, o_isz) > budget:
        tm = max(8, _round_up(tm // 2, 8))
    return tm


def _patch_embed_ln_kernel(x_ref, w_ref, vec_ref, o_ref, *, inv_d, compute_dtype):
    """(tile_m, K) @ (K, D) + bias, then LayerNorm over D, for one row tile."""
    x = x_ref[...].astype(compute_dtype)            # cast in-kernel (VPU slack)
    y = jnp.dot(x, w_ref[...], preferred_element_type=jnp.float32)
    vec = vec_ref[...]                               # (3, D) f32: bias/gamma/beta
    y = y + vec[0:1, :]
    # One-pass LN statistics in f32; clamp variance against cancellation.
    s1 = jnp.sum(y, axis=-1, keepdims=True)
    s2 = jnp.sum(y * y, axis=-1, keepdims=True)
    mean = s1 * inv_d
    var = jnp.maximum(s2 * inv_d - mean * mean, 0.0)
    y_hat = (y - mean) * jax.lax.rsqrt(var + LN_EPS)
    o_ref[...] = (y_hat * vec[1:2, :] + vec[2:3, :]).astype(o_ref.dtype)


def _patch_embed_kernel(x_ref, w_ref, vec_ref, o_ref, *, compute_dtype):
    """Matmul + bias (no normalization) for one row tile."""
    x = x_ref[...].astype(compute_dtype)
    y = jnp.dot(x, w_ref[...], preferred_element_type=jnp.float32)
    o_ref[...] = (y + vec_ref[...]).astype(o_ref.dtype)


@functools.partial(
    jax.jit,
    static_argnames=("normalize", "tile_m", "compute_dtype", "out_dtype"))
def patch_embed(x, conv_w, conv_b, gamma, beta, *, normalize=True,
                tile_m=1024, compute_dtype=jnp.bfloat16, out_dtype=None):
    """Pallas PatchEmbed.

    Args:
      x:       (B, M, C, P, P) input patches (read at native dtype).
      conv_w:  (D, C, P, P)    Conv2d weight.
      conv_b:  (D,)            Conv2d bias.
      gamma:   (D,)            LayerNorm weight (used iff normalize).
      beta:    (D,)            LayerNorm bias   (used iff normalize).
      normalize:     apply LayerNorm over D.
      tile_m:        maximum row tile; actual tile is derived from the VMEM
                     budget and the row count.
      compute_dtype: matmul input dtype (bf16 feeds the MXU at full rate;
                     accumulation and LN are always f32).  f32 matches the
                     PyTorch reference numerics more closely.
      out_dtype:     output dtype; None -> x.dtype (module semantics).

    Returns:
      (B, M, D) embeddings.
    """
    B, M, C, P, P2 = x.shape
    assert P == P2, "PatchEmbed expects square patches"
    D = conv_w.shape[0]
    K = C * P * P
    N = B * M
    if out_dtype is None:
        out_dtype = x.dtype

    # Pure-metadata reshape; NO dtype cast here (cast happens in-kernel).
    x_flat = x.reshape(N, K)
    w = conv_w.reshape(D, K).T.astype(compute_dtype)          # (K, D)

    # Contraction-dim alignment: zero-pad K to a multiple of 128 only when it
    # is misaligned AND large enough that masked loads / partial MXU passes
    # would cost more than one extra materialization pass over x.
    Kp = K
    if K % 128 != 0 and K > 128:
        Kp = _round_up(K, 128)
        x_flat = jnp.pad(x_flat, ((0, 0), (0, Kp - K)))
        w = jnp.pad(w, ((0, Kp - K), (0, 0)))

    if normalize:
        vec = jnp.stack([conv_b, gamma, beta]).astype(jnp.float32)   # (3, D)
    else:
        vec = conv_b.reshape(1, D).astype(jnp.float32)               # (1, D)

    x_isz = jnp.dtype(x_flat.dtype).itemsize
    c_isz = jnp.dtype(compute_dtype).itemsize
    o_isz = jnp.dtype(out_dtype).itemsize

    budget = _vmem_budget_bytes()
    tm = _select_tile_m(N, Kp, D, x_isz, c_isz, o_isz, budget, tile_m)
    grid = (pl.cdiv(N, tm),)            # ragged last tile is masked by Pallas

    x_spec = pl.BlockSpec((tm, Kp), lambda i: (i, 0))
    # Weight / LN vectors are grid-invariant: single-buffer them so they do
    # not burn 2x VMEM (frees room for a larger row tile).
    w_spec = pl.BlockSpec((Kp, D), lambda i: (0, 0),
                          pipeline_mode=pl.Buffered(1))
    vec_spec = pl.BlockSpec(vec.shape, lambda i: (0, 0),
                            pipeline_mode=pl.Buffered(1))
    # Last dim == full array dim D, so the (8,128) rule holds for any D and no
    # output padding / slicing pass is needed.
    out_spec = pl.BlockSpec((tm, D), lambda i: (i, 0))

    need = _vmem_needed(tm, Kp, D, x_isz, c_isz, o_isz)
    vmem_limit = int(min(max(2 * need, 32 << 20), budget))

    cost = pl.CostEstimate(
        flops=int(2 * N * Kp * D),
        transcendentals=int(N if normalize else 0),
        bytes_accessed=int(N * Kp * x_isz + Kp * D * c_isz
                           + vec.size * 4 + N * D * o_isz),
    )
    cparams = pltpu.CompilerParams(
        dimension_semantics=("parallel",),
        vmem_limit_bytes=vmem_limit,
    )

    if normalize:
        kernel = functools.partial(_patch_embed_ln_kernel,
                                   inv_d=1.0 / float(D),
                                   compute_dtype=compute_dtype)
    else:
        kernel = functools.partial(_patch_embed_kernel,
                                   compute_dtype=compute_dtype)

    out = pl.pallas_call(
        kernel,
        out_shape=jax.ShapeDtypeStruct((N, D), out_dtype),
        grid_spec=pltpu.PrefetchScalarGridSpec(
            num_scalar_prefetch=0,
            grid=grid,
            in_specs=[x_spec, w_spec, vec_spec],
            out_specs=out_spec,
        ),
        compiler_params=cparams,
        cost_estimate=cost,
    )(x_flat, w, vec)

    return out.reshape(B, M, D)


def _reference(x, conv_w, conv_b, gamma, beta, normalize=True):
    """Pure-JAX reference matching the PyTorch forward."""
    B, M, C, P, _ = x.shape
    D = conv_w.shape[0]
    xf = x.reshape(B * M, C * P * P)
    wf = conv_w.reshape(D, C * P * P)
    y = xf @ wf.T + conv_b
    if normalize:
        mean = y.mean(-1, keepdims=True)
        var = ((y - mean) ** 2).mean(-1, keepdims=True)
        y = (y - mean) / jnp.sqrt(var + LN_EPS) * gamma + beta
    return y.reshape(B, M, D)


if __name__ == "__main__":
    # Small shapes consistent with the module: B=2 batches, M=8 patches per
    # sample, C=4 input channels, patch_size=4, embed_dim=32.
    B, M, C, P, D = 2, 8, 4, 4, 32

    key = jax.random.PRNGKey(0)
    kx, kw, kb, kg, kbt = jax.random.split(key, 5)
    x = jax.random.normal(kx, (B, M, C, P, P), dtype=jnp.float32)
    conv_w = jax.random.normal(kw, (D, C, P, P), dtype=jnp.float32) * 0.05
    conv_b = jax.random.normal(kb, (D,), dtype=jnp.float32) * 0.01
    gamma = 1.0 + 0.1 * jax.random.normal(kg, (D,), dtype=jnp.float32)
    beta = 0.1 * jax.random.normal(kbt, (D,), dtype=jnp.float32)

    ref_ln = _reference(x, conv_w, conv_b, gamma, beta, normalize=True)
    ref_plain = _reference(x, conv_w, conv_b, gamma, beta, normalize=False)

    # f32 compute path (tolerance covers MXU f32-decomposition rounding).
    out_f32 = jax.block_until_ready(
        patch_embed(x, conv_w, conv_b, gamma, beta, normalize=True,
                    compute_dtype=jnp.float32))
    assert out_f32.shape == (B, M, D), out_f32.shape
    assert jnp.allclose(out_f32, ref_ln, atol=2e-2, rtol=2e-2), (
        float(jnp.max(jnp.abs(out_f32 - ref_ln))))

    # Default bf16 compute path (MXU-rate on v5e/v6e/v7x) — looser tolerance.
    out_bf16 = jax.block_until_ready(
        patch_embed(x, conv_w, conv_b, gamma, beta, normalize=True))
    assert out_bf16.shape == (B, M, D), out_bf16.shape
    assert jnp.allclose(out_bf16, ref_ln, atol=5e-2, rtol=5e-2), (
        float(jnp.max(jnp.abs(out_bf16 - ref_ln))))

    # bf16 output dtype (smaller HBM write stream).
    out_bf16o = jax.block_until_ready(
        patch_embed(x, conv_w, conv_b, gamma, beta, normalize=True,
                    out_dtype=jnp.bfloat16))
    assert out_bf16o.dtype == jnp.bfloat16
    assert jnp.allclose(out_bf16o.astype(jnp.float32), ref_ln,
                        atol=6e-2, rtol=6e-2), (
        float(jnp.max(jnp.abs(out_bf16o.astype(jnp.float32) - ref_ln))))

    # normalize=False path.
    out_plain = jax.block_until_ready(
        patch_embed(x, conv_w, conv_b, gamma, beta, normalize=False))
    assert out_plain.shape == (B, M, D), out_plain.shape
    assert jnp.allclose(out_plain, ref_plain, atol=2e-2, rtol=2e-2), (
        float(jnp.max(jnp.abs(out_plain - ref_plain))))

    # Ragged row count (N = 3*5 = 15) exercises the masked last grid step.
    B2, M2 = 3, 5
    x2 = jax.random.normal(kx, (B2, M2, C, P, P), dtype=jnp.float32)
    ref2 = _reference(x2, conv_w, conv_b, gamma, beta, normalize=True)
    out2 = jax.block_until_ready(
        patch_embed(x2, conv_w, conv_b, gamma, beta, normalize=True,
                    compute_dtype=jnp.float32))
    assert out2.shape == (B2, M2, D), out2.shape
    assert jnp.allclose(out2, ref2, atol=2e-2, rtol=2e-2), (
        float(jnp.max(jnp.abs(out2 - ref2))))

    print("KERNEL_OK")
</pallas_src>

<mosaic_0001>
module attributes {stable_mosaic.version = 11 : i64} {
  func.func @_patch_embed_ln_kernel(%arg0: i32, %arg1: memref<8x64xf32, #tpu.memory_space<vmem>>, %arg2: memref<64x32xf32, #tpu.memory_space<vmem>>, %arg3: memref<3x32xf32, #tpu.memory_space<vmem>>, %arg4: memref<8x32xf32, #tpu.memory_space<vmem>>) attributes {dimension_semantics = [#tpu.dimension_semantics<parallel>], iteration_bounds = array<i64: 2>, scalar_prefetch = 0 : i64, scratch_operands = 0 : i64, tpu.core_type = #tpu.core_type<tc>, window_params = [{transform_indices = @transform_0, window_bounds = array<i64: 8, 64>}, {pipeline_mode = #tpu.pipeline_mode<synchronous>, transform_indices = @transform_1, window_bounds = array<i64: 64, 32>}, {pipeline_mode = #tpu.pipeline_mode<synchronous>, transform_indices = @transform_2, window_bounds = array<i64: 3, 32>}, {transform_indices = @transform_3, window_bounds = array<i64: 8, 32>}]} {
    %c0 = arith.constant 0 : index
    %c0_0 = arith.constant 0 : index
    %0 = vector.load %arg1[%c0, %c0_0] : memref<8x64xf32, #tpu.memory_space<vmem>>, vector<8x64xf32>
    %c0_1 = arith.constant 0 : index
    %c0_2 = arith.constant 0 : index
    %1 = vector.load %arg2[%c0_1, %c0_2] : memref<64x32xf32, #tpu.memory_space<vmem>>, vector<64x32xf32>
    %cst = arith.constant dense<0.000000e+00> : vector<8x32xf32>
    %2 = tpu.matmul %0, %1, %cst {dimension_numbers = #tpu.dot_dimension_numbers<[1], [0], [0], [1], [0, 0, 1, 1], [], []>} : vector<8x64xf32>, vector<64x32xf32>, vector<8x32xf32> -> vector<8x32xf32>
    %c0_3 = arith.constant 0 : index
    %c0_4 = arith.constant 0 : index
    %3 = vector.load %arg3[%c0_3, %c0_4] : memref<3x32xf32, #tpu.memory_space<vmem>>, vector<3x32xf32>
    %4 = vector.extract_strided_slice %3 {offsets = [0, 0], sizes = [1, 32], strides = [1, 1]} : vector<3x32xf32> to vector<1x32xf32>
    %5 = vector.broadcast %4 : vector<1x32xf32> to vector<8x32xf32>
    %6 = arith.addf %2, %5 : vector<8x32xf32>
    %cst_5 = arith.constant dense<0.000000e+00> : vector<8xf32>
    %7 = vector.multi_reduction <add>, %6, %cst_5 [1] : vector<8x32xf32> to vector<8xf32>
    %8 = vector.shape_cast %7 : vector<8xf32> to vector<8x1xf32>
    %9 = arith.mulf %6, %6 : vector<8x32xf32>
    %cst_6 = arith.constant dense<0.000000e+00> : vector<8xf32>
    %10 = vector.multi_reduction <add>, %9, %cst_6 [1] : vector<8x32xf32> to vector<8xf32>
    %11 = vector.shape_cast %10 : vector<8xf32> to vector<8x1xf32>
    %cst_7 = arith.constant 3.125000e-02 : f32
    %12 = vector.broadcast %cst_7 : f32 to vector<8x1xf32>
    %13 = arith.mulf %8, %12 : vector<8x1xf32>
    %cst_8 = arith.constant 3.125000e-02 : f32
    %14 = vector.broadcast %cst_8 : f32 to vector<8x1xf32>
    %15 = arith.mulf %11, %14 : vector<8x1xf32>
    %16 = arith.mulf %13, %13 : vector<8x1xf32>
    %17 = arith.subf %15, %16 : vector<8x1xf32>
    %cst_9 = arith.constant 0.000000e+00 : f32
    %18 = vector.broadcast %cst_9 : f32 to vector<8x1xf32>
    %19 = arith.maximumf %17, %18 : vector<8x1xf32>
    %20 = vector.broadcast %13 : vector<8x1xf32> to vector<8x32xf32>
    %21 = arith.subf %6, %20 : vector<8x32xf32>
    %cst_10 = arith.constant 9.99999974E-6 : f32
    %22 = vector.broadcast %cst_10 : f32 to vector<8x1xf32>
    %23 = arith.addf %19, %22 : vector<8x1xf32>
    %24 = math.rsqrt %23 : vector<8x1xf32>
    %25 = vector.broadcast %24 : vector<8x1xf32> to vector<8x32xf32>
    %26 = arith.mulf %21, %25 : vector<8x32xf32>
    %27 = vector.extract_strided_slice %3 {offsets = [1, 0], sizes = [1, 32], strides = [1, 1]} : vector<3x32xf32> to vector<1x32xf32>
    %28 = vector.broadcast %27 : vector<1x32xf32> to vector<8x32xf32>
    %29 = arith.mulf %26, %28 : vector<8x32xf32>
    %30 = vector.extract_strided_slice %3 {offsets = [2, 0], sizes = [1, 32], strides = [1, 1]} : vector<3x32xf32> to vector<1x32xf32>
    %31 = vector.broadcast %30 : vector<1x32xf32> to vector<8x32xf32>
    %32 = arith.addf %29, %31 : vector<8x32xf32>
    %c0_11 = arith.constant 0 : index
    %c0_12 = arith.constant 0 : index
    %33 = vector.load %arg4[%c0_11, %c0_12] : memref<8x32xf32, #tpu.memory_space<vmem>>, vector<8x32xf32>
    tpu.vector_store %arg4[%c0_11, %c0_12], %32 {strides = array<i32>} : memref<8x32xf32, #tpu.memory_space<vmem>>, vector<8x32xf32>,
    return
  }
  func.func @transform_0(%arg0: i32) -> (i32, i32) {
    %c0_i32 = arith.constant 0 : i32
    %c0_i32_0 = arith.constant 0 : i32
    return %arg0, %c0_i32 : i32, i32
  }
  func.func @transform_1(%arg0: i32) -> (i32, i32) {
    %c0_i32 = arith.constant 0 : i32
    %c0_i32_0 = arith.constant 0 : i32
    %c0_i32_1 = arith.constant 0 : i32
    return %c0_i32, %c0_i32_0 : i32, i32
  }
  func.func @transform_2(%arg0: i32) -> (i32, i32) {
    %c0_i32 = arith.constant 0 : i32
    %c0_i32_0 = arith.constant 0 : i32
    %c0_i32_1 = arith.constant 0 : i32
    return %c0_i32, %c0_i32_0 : i32, i32
  }
  func.func @transform_3(%arg0: i32) -> (i32, i32) {
    %c0_i32 = arith.constant 0 : i32
    %c0_i32_0 = arith.constant 0 : i32
    return %arg0, %c0_i32 : i32, i32
  }
}

</mosaic_0001>

<llo_original>
// kernel: patch_embed.1
$region0: #{patch_embed.1}
  #allocation0 [shape = 'u32[]', space=smem, size = 0x4, offset = 0x4, fixed_abs, tag = 'smem constant byte address 0x4 - core index']
  #allocation1 [shape = 'u32[144,128]{1,0:T(1,128)}', space=vmem, size = 0x12000, scoped, tag = 'internal scratch']
  %s0 = inlined_call_operand.vmem [shape: f32[16,64], index: 0, kind: input, shape index: {}]
  %s1 = inlined_call_operand.vmem [shape: f32[64,32], index: 1, kind: input, shape index: {}]
  %s2 = inlined_call_operand.vmem [shape: f32[3,32], index: 2, kind: input, shape index: {}]
  %s3 = inlined_call_operand.hbm [shape: f32[16,32], index: 3, kind: output, shape index: {}]
  %s4 = sld [smem:[#allocation0]]
  $region45: #{patch_embed.1} parent=0
    _
  %s6 = ssub.s32 1, %s4
  %s7 = scalar_select 0, %s6, %s4
  $region1: #{patch_embed.1} parent=0
    #allocation2 [shape = 'u8[8192]{0}', space=vmem, size = 0x2000, scoped, tag = 'output window, operand 0']
    #allocation3 [shape = 's32[2]{0}', space=sflag, size = 0x8, scoped, tag = 'scoped memory for patch_embed.1']
    %8 = vsyncpa [#allocation3], 0
    %s9 = scalar_lea.sflag [#allocation3], 1
    %10 = vsyncpa %s9, 0
    loop: start=0, step=1, limit=4
    $region2: #{patch_embed.1} parent=1 // loop_pre_header
      _
    $region3: #{patch_embed.1} parent=1 // loop_header
      %s12 = sphi 0, %s16
      %p13 = scmp.ge.s32.totalorder %s12, 4
      %s22 = sphi 0, %s24
      %s25 = sphi 0, %s22
      %s26 = sphi 0, %s25
      %s42 = sphi 0, %s26
      %s46 = sphi 0, %s46
      %s48 = sphi 0, %s46
      %s49 = sphi 0, %s48
      %s63 = sphi 0, %s49
      %s67 = sphi 0, %s67
      %s69 = sphi 0, %s67
      %s70 = sphi 0, %s69
      %s84 = sphi 0, %s70
      %s90 = sphi 0, %s92
      %s93 = sphi 0, %s90
      %s94 = sphi 0, %s93
      %s110 = sphi 0, %s94
    $region4: #{patch_embed.1} parent=1 // loop_header_branch
      %15 = sbr.rel (%p13) target = $region8
    $region5: #{patch_embed.1} parent=1 // loop_body
      %s17 = ssub.s32 %s12, 1
      %s18 = ssub.s32 %s12, 2
      %s19 = sadd.s32 %s12, 1
      %s20 = ssub.s32 %s12, %s19
      %p21 = scmp.eq.s32.totalorder %s20, 0
      %s23 = sadd.s32 %s22, 1
      %s24 = scalar_select %p21, %s22, %s23
      %p27 = pneg %p21
      %p28 = scmp.eq.s32.totalorder %s12, 1
      %p29 = por %p27, %p28
      %p30 = scmp.ne.s32.totalorder %s22, %s25
      %p31 = scmp.eq.s32.totalorder %s12, 0
      %p32 = por %p30, %p31
      %p33 = scmp.ne.s32.totalorder %s22, %s25
      %p34 = scmp.eq.s32.totalorder %s17, 1
      %p35 = por %p33, %p34
      %p36 = scmp.ne.s32.totalorder %s25, %s26
      %p37 = scmp.eq.s32.totalorder %s17, 0
      %p38 = por %p36, %p37
      %p39 = scmp.ne.s32.totalorder %s25, %s26
      %p40 = scmp.eq.s32.totalorder %s18, 1
      %p41 = por %p39, %p40
      %p43 = scmp.ne.s32.totalorder %s26, %s42
      %p44 = scmp.eq.s32.totalorder %s18, 0
      %p45 = por %p43, %p44
      %s47 = sadd.s32 %s46, 1
      %p50 = scmp.eq.s32.totalorder %s12, 1
      %p51 = scmp.ne.s32.totalorder %s46, %s48
      %p52 = scmp.eq.s32.totalorder %s12, 0
      %p53 = por %p51, %p52
      %p54 = scmp.ne.s32.totalorder %s46, %s48
      %p55 = scmp.eq.s32.totalorder %s17, 1
      %p56 = por %p54, %p55
      %p57 = scmp.ne.s32.totalorder %s48, %s49
      %p58 = scmp.eq.s32.totalorder %s17, 0
      %p59 = por %p57, %p58
      %p60 = scmp.ne.s32.totalorder %s48, %s49
      %p61 = scmp.eq.s32.totalorder %s18, 1
      %p62 = por %p60, %p61
      %p64 = scmp.ne.s32.totalorder %s49, %s63
      %p65 = scmp.eq.s32.totalorder %s18, 0
      %p66 = por %p64, %p65
      %s68 = sadd.s32 %s67, 1
      %p71 = scmp.eq.s32.totalorder %s12, 1
      %p72 = scmp.ne.s32.totalorder %s67, %s69
      %p73 = scmp.eq.s32.totalorder %s12, 0
      %p74 = por %p72, %p73
      %p75 = scmp.ne.s32.totalorder %s67, %s69
      %p76 = scmp.eq.s32.totalorder %s17, 1
      %p77 = por %p75, %p76
      %p78 = scmp.ne.s32.totalorder %s69, %s70
      %p79 = scmp.eq.s32.totalorder %s17, 0
      %p80 = por %p78, %p79
      %p81 = scmp.ne.s32.totalorder %s69, %s70
      %p82 = scmp.eq.s32.totalorder %s18, 1
      %p83 = por %p81, %p82
      %p85 = scmp.ne.s32.totalorder %s70, %s84
      %p86 = scmp.eq.s32.totalorder %s18, 0
      %p87 = por %p85, %p86
      %s88 = ssub.s32 %s12, %s19
      %p89 = scmp.eq.s32.totalorder %s88, 0
      %s91 = sadd.s32 %s90, 1
      %s92 = scalar_select %p89, %s90, %s91
      %p95 = pneg %p89
      %p96 = scmp.eq.s32.totalorder %s12, 1
      %p97 = por %p95, %p96
      %p98 = scmp.ne.s32.totalorder %s90, %s93
      %p99 = scmp.eq.s32.totalorder %s12, 0
      %p100 = por %p98, %p99
      %p101 = scmp.ne.s32.totalorder %s90, %s93
      %p102 = scmp.eq.s32.totalorder %s17, 1
      %p103 = por %p101, %p102
      %p104 = scmp.ne.s32.totalorder %s93, %s94
      %p105 = scmp.eq.s32.totalorder %s17, 0
      %p106 = por %p104, %p105
      %p107 = scmp.ne.s32.totalorder %s93, %s94
      %p108 = scmp.eq.s32.totalorder %s18, 1
      %p109 = por %p107, %p108
      %p111 = scmp.ne.s32.totalorder %s94, %s110
      %p112 = scmp.eq.s32.totalorder %s18, 0
      %p113 = por %p111, %p112
      %p114 = scmp.le.s32.totalorder 1, %s12
      %p115 = scmp.lt.s32.totalorder %s12, 3
      %p116 = pnand %p114, %p115
      %p117 = pneg %p116
      // Predicated region
      $region9: #{patch_embed.1} parent=5 // pred_check
        _
      $region10: #{patch_embed.1} parent=5 // pred_check_branch
        %119 = sbr.rel (%p116) target = $region12
      $region11: #{patch_embed.1} parent=5 // pred_region
        %s120 = ssub.s32 %s12, 1
        // Predicated region
        $region13: #{patch_embed.1} parent=11 // pred_check
          %p121 = pneg %p59
        $region14: #{patch_embed.1} parent=11 // pred_check_branch
          %123 = sbr.rel (%p121) target = $region16
        $region15: #{patch_embed.1} parent=11 // pred_region
          _
        $region16: #{patch_embed.1} parent=11 // pred_fallthru
          _
        // Predicated region
        $region17: #{patch_embed.1} parent=11 // pred_check
          %p124 = pneg %p80
        $region18: #{patch_embed.1} parent=11 // pred_check_branch
          %126 = sbr.rel (%p124) target = $region20
        $region19: #{patch_embed.1} parent=11 // pred_region
          _
        $region20: #{patch_embed.1} parent=11 // pred_fallthru
          _
      $region12: #{patch_embed.1} parent=5 // pred_fallthru
        _
      %p127 = scmp.lt.s32.totalorder %s12, 2
      // Predicated region
      $region21: #{patch_embed.1} parent=5 // pred_check
        %p128 = pneg %p127
      $region22: #{patch_embed.1} parent=5 // pred_check_branch
        %130 = sbr.rel (%p128) target = $region24
      $region23: #{patch_embed.1} parent=5 // pred_region
        // Predicated region
        $region25: #{patch_embed.1} parent=23 // pred_check
          %p131 = pneg %p32
        $region26: #{patch_embed.1} parent=23 // pred_check_branch
          %133 = sbr.rel (%p131) target = $region28
        $region27: #{patch_embed.1} parent=23 // pred_region
          %p134 = scmp.lt.s32.totalorder %s12, 1
          %s135 = scalar_select %p134, %s12, 1
          %s136 = smul.addr %s135, 8
          %s137 = scalar_lea.vmem %s0, %s136
        $region28: #{patch_embed.1} parent=23 // pred_fallthru
          _
      $region24: #{patch_embed.1} parent=5 // pred_fallthru
        _
      %p138 = scmp.le.s32.totalorder 1, %s12
      %p139 = scmp.lt.s32.totalorder %s12, 3
      %p140 = pnand %p138, %p139
      %p141 = pneg %p140
      // Predicated region
      $region29: #{patch_embed.1} parent=5 // pred_check
        _
      $region30: #{patch_embed.1} parent=5 // pred_check_branch
        %143 = sbr.rel (%p140) target = $region32
      $region31: #{patch_embed.1} parent=5 // pred_region
        %s144 = ssub.s32 %s12, 1
        %p145 = scmp.lt.s32.totalorder %s17, 1
        %s146 = scalar_select %p145, %s17, 1
        %s147 = smul.addr %s146, 8
        %s148 = scalar_lea.vmem %s0, %s147
        %p149 = pneg %p38
        %p150 = pneg %p35
        %p151 = pneg %p59
        %p152 = pneg %p56
        %p153 = pneg %p80
        %p154 = pneg %p77
        %p155 = pneg %p106
        %p156 = pneg %p103
        %s157 = sand.u32 %s93, 1
        %s158 = scalar_lea.sflag [#allocation3], %s157
        %s159 = sand.u32 %s93, 1
        %s160 = smul.addr %s159, 8
        %s161 = scalar_lea.vmem [#allocation2], %s160
        %p162 = scmp.lt.s32.totalorder %s17, 1
        %s163 = scalar_select %p162, %s17, 1
        %s164 = smul.addr %s163, 8
        %s165 = scalar_lea.vmem %s0, %s164
        %v166 = vld [vmem:[%s165] sm:$0xff]
        %v167 = vld [vmem:[%s1] sm:$0xff]
        %v168 = vld [vmem:[%s1 + $0x8] sm:$0xff]
        %v169 = vld [vmem:[%s1 + $0x10] sm:$0xff]
        %v170 = vld [vmem:[%s1 + $0x18] sm:$0xff]
        %v171 = vld [vmem:[%s1 + $0x20] sm:$0xff]
        %v172 = vld [vmem:[%s1 + $0x28] sm:$0xff]
        %v173 = vld [vmem:[%s1 + $0x30] sm:$0xff]
        %v174 = vld [vmem:[%s1 + $0x38] sm:$0xff]
        %v175 = vld [vmem:[%s2] sm:$0x7]
        %v176 = vlaneseq
        %v177 = vshrl.u32 %v176, 7
        %v178 = vsub.s32 0, %v177
        %v179 = vrot.slane %v175, %v178
        %vm180 = vcmask 523264
        %v182 = vsel %vm180, %v166, 0
        %184 = vmatprep.subr.mxu0 0.0
        %185 = vmatpush1.msra.mxu0 0.0
        %186 = vmatprep.subr.mxu0 0.0
        %187 = vmatpush1.msra.mxu0 0.0
        %188 = vmatprep.subr.mxu0 0.0
        %189 = vmatpush1.msra.mxu0 0.0
        %190 = vmatprep.subr.mxu0 0.0
        %191 = vmatpush1.msra.mxu0 0.0
        %192 = vmatprep.subr.mxu0 0.0
        %193 = vmatpush1.msra.mxu0 0.0
        %194 = vmatprep.subr.mxu0 0.0
        %195 = vmatpush1.msra.mxu0 0.0
        %196 = vmatprep.subr.mxu0 0.0
        %197 = vmatpush1.msra.mxu0 0.0
        %198 = vmatprep.subr.mxu0 0.0
        %199 = vmatpush1.msra.mxu0 0.0
        %200 = vmatprep.subr.mxu0 0.0
        %201 = vmatpush1.msra.mxu0 %v174
        %202 = vmatprep.subr.mxu0 0.0
        %203 = vmatpush1.msra.mxu0 %v173
        %204 = vmatprep.subr.mxu0 0.0
        %205 = vmatpush1.msra.mxu0 %v172
        %206 = vmatprep.subr.mxu0 0.0
        %207 = vmatpush1.msra.mxu0 %v171
        %208 = vmatprep.subr.mxu0 0.0
        %209 = vmatpush1.msra.mxu0 %v170
        %210 = vmatprep.subr.mxu0 0.0
        %211 = vmatpush1.msra.mxu0 %v169
        %212 = vmatprep.subr.mxu0 0.0
        %213 = vmatpush1.msra.mxu0 %v168
        %214 = vmatprep.subr.mxu0 0.0
        %215 = vmatpush1.msra.mxu0 %v167
        %216 = vmatprep.subr.mxu0 0.0
        %217 = vmatpush2.msra.mxu0 0.0
        %218 = vmatprep.subr.mxu0 0.0
        %219 = vmatpush2.msra.mxu0 0.0
        %220 = vmatprep.subr.mxu0 0.0
        %221 = vmatpush2.msra.mxu0 0.0
        %222 = vmatprep.subr.mxu0 0.0
        %223 = vmatpush2.msra.mxu0 0.0
        %224 = vmatprep.subr.mxu0 0.0
        %225 = vmatpush2.msra.mxu0 0.0
        %226 = vmatprep.subr.mxu0 0.0
        %227 = vmatpush2.msra.mxu0 0.0
        %228 = vmatprep.subr.mxu0 0.0
        %229 = vmatpush2.msra.mxu0 0.0
        %230 = vmatprep.subr.mxu0 0.0
        %231 = vmatpush2.msra.mxu0 0.0
        %232 = vmatprep.subr.mxu0 0.0
        %233 = vmatpush2.msra.mxu0 0.0
        %234 = vmatprep.subr.mxu0 0.0
        %235 = vmatpush2.msra.mxu0 0.0
        %236 = vmatprep.subr.mxu0 0.0
        %237 = vmatpush2.msra.mxu0 0.0
        %238 = vmatprep.subr.mxu0 0.0
        %239 = vmatpush2.msra.mxu0 0.0
        %240 = vmatprep.subr.mxu0 0.0
        %241 = vmatpush2.msra.mxu0 0.0
        %242 = vmatprep.subr.mxu0 0.0
        %243 = vmatpush2.msra.mxu0 0.0
        %244 = vmatprep.subr.mxu0 0.0
        %245 = vmatpush2.msra.mxu0 0.0
        %246 = vmatprep.subr.mxu0 0.0
        %247 = vmatpush2.msra.mxu0 0.0
        %248 = vmatprep.mubr.f32.mxu0 0.0
        %249 = vmatmul.mubr.f32.gmra.mxu0 %v182
        %v250 = vpop.f32.mrf.mxu0
        %v251 = vadd.f32 %v179, %v250
        %v252 = vpop.f32.mrf.mxu0
        %253 = vdwg.mxu0
        %vm254 = vcmask 261120
        %v255 = vsel %vm254, %v251, 0.0
        %256 = vadd.xlane.f32.xlu0 %v255
        %v257 = vpop.xlane.xlu0 %256
        %v258 = vmul.f32 %v251, %v251
        %v259 = vsel %vm254, %v258, 0.0
        %260 = vadd.xlane.f32.xlu0 %v259
        %v261 = vpop.xlane.xlu0 %260
        %v262 = vmul.f32 %v257, 0.03125
        %v263 = vmul.f32 %v261, 0.03125
        %v264 = vmul.f32 %v262, %v262
        %v265 = vsub.f32 %v263, %v264
        %v266 = vmax.f32 %v265, 0.0
        %v267 = vsub.f32 %v251, %v262
        %v268 = vadd.f32 %v266, 1e-05
        %v269 = vrsqrt.pop %v268
        %v270 = vmul.f32 %v267, %v269
        %v271 = vlaneseq
        %v272 = vshrl.u32 %v271, 7
        %v273 = vsub.s32 1, %v272
        %v274 = vrot.slane %v175, %v273
        %v275 = vmul.f32 %v270, %v274
        %v276 = vlaneseq
        %v277 = vshrl.u32 %v276, 7
        %v278 = vsub.s32 2, %v277
        %v279 = vrot.slane %v175, %v278
        %v280 = vadd.f32 %v275, %v279
        %281 = vst.msk [vmem:[%s161] sm:$0xff] %vm254, %v280
        %s282 = sand.u32 %s93, 1
        %s283 = scalar_lea.sflag [#allocation3], %s282
        %s284 = sand.u32 %s93, 1
        %s285 = smul.addr %s284, 8
        %s286 = scalar_lea.vmem [#allocation2], %s285
        // Predicated region
        $region33: #{patch_embed.1} parent=31 // pred_check
          %p287 = pneg %p103
        $region34: #{patch_embed.1} parent=31 // pred_check_branch
          %289 = sbr.rel (%p287) target = $region36
        $region35: #{patch_embed.1} parent=31 // pred_region
          %s291 = ssub.s32 128, 128
          %292 = vsyncadd %s283, %s291
          %s293 = smul.addr %s17, 128
          %s294 = scalar_lea.hbm %s3, %s293
          %s296 = sshll.u32 %s286, 4
          %s297 = int_to_ptr.vmem [resolvable:$true] %s296
          %299 = dma.vmem_to_hbm [thread:$0]  %s297, 128, %s294, %s283
        $region36: #{patch_embed.1} parent=31 // pred_fallthru
          _
      $region32: #{patch_embed.1} parent=5 // pred_fallthru
        _
      %p300 = scmp.le.s32.totalorder 2, %s12
      // Predicated region
      $region37: #{patch_embed.1} parent=5 // pred_check
        %p301 = pneg %p300
      $region38: #{patch_embed.1} parent=5 // pred_check_branch
        %303 = sbr.rel (%p301) target = $region40
      $region39: #{patch_embed.1} parent=5 // pred_region
        %s304 = ssub.s32 %s12, 2
        // Predicated region
        $region41: #{patch_embed.1} parent=39 // pred_check
          %p305 = pneg %p109
        $region42: #{patch_embed.1} parent=39 // pred_check_branch
          %307 = sbr.rel (%p305) target = $region44
        $region43: #{patch_embed.1} parent=39 // pred_region
          %s308 = sand.u32 %s94, 1
          %s309 = scalar_lea.sflag [#allocation3], %s308
          %s310 = sand.u32 %s94, 1
          %s311 = smul.addr %s310, 8
          %s312 = scalar_lea.vmem [#allocation2], %s311
          %313 = dma.done %s309, 128
        $region44: #{patch_embed.1} parent=39 // pred_fallthru
          _
      $region40: #{patch_embed.1} parent=5 // pred_fallthru
        _
    $region6: #{patch_embed.1} parent=1 // loop_footer
      %s16 = sadd.s32 1, %s12
    $region7: #{patch_embed.1} parent=1 // loop_footer_branch
      %11 = sbr.rel target = $region3
    $region8: #{patch_embed.1} parent=1 // loop_exit
      _
    %314 = vsyncpa [#allocation3], 1
    %s315 = scalar_lea.sflag [#allocation3], 1
    %316 = vsyncpa %s315, 1

</llo_original>
